<compile_context>
chip_gen: v5e
topology: v5e:2x2
jax: 0.10.0
libtpu: 0.0.40
codegen_flags: <defaults>
</compile_context>

<pallas_src>
import functools

import jax
import jax.numpy as jnp
from jax.experimental import pallas as pl
from jax.experimental.pallas import tpu as pltpu

# Per-stream tile budget (bytes). 6 streams x 2 pipeline buffers x 1 MiB
# stays under the 16 MiB default scoped VMEM of v5e, well under v6e/v7x.
_MAX_TILE_BYTES = 1 << 20


def _choose_tile_rows(B, D, itemsize):
    """Largest multiple-of-8 row tile whose (rows, D) slab fits the budget."""
    if B <= 8:
        return B  # full-extent block is always a legal block shape
    row_bytes = max(D * itemsize, 1)
    tb = min(B, _MAX_TILE_BYTES // row_bytes)
    tb = max(8, (tb // 8) * 8)
    return min(tb, B)


def _make_pid_kernels(kp, ki, kd):
    """Build kernels with the gains folded in as compile-time constants."""
    kp = float(kp)
    ki = float(ki)
    kd = float(kd)

    def kernel_ff(err_ref, errdot_ref, ff_ref, integ_in_ref,
                  out_ref, integ_out_ref):
        err = err_ref[...].astype(jnp.float32)
        new_integ = integ_in_ref[...].astype(jnp.float32) + err
        integ_out_ref[...] = new_integ.astype(integ_out_ref.dtype)
        out_ref[...] = (kp * err
                        + ki * new_integ
                        + kd * errdot_ref[...].astype(jnp.float32)
                        + ff_ref[...].astype(jnp.float32)
                        ).astype(out_ref.dtype)

    def kernel_noff(err_ref, errdot_ref, integ_in_ref,
                    out_ref, integ_out_ref):
        err = err_ref[...].astype(jnp.float32)
        new_integ = integ_in_ref[...].astype(jnp.float32) + err
        integ_out_ref[...] = new_integ.astype(integ_out_ref.dtype)
        out_ref[...] = (kp * err
                        + ki * new_integ
                        + kd * errdot_ref[...].astype(jnp.float32)
                        ).astype(out_ref.dtype)

    return kernel_ff, kernel_noff


def _pid_pallas_call(kernel, arrays, integ_input_index, integ_dtype):
    """Tiled, pipelined pallas_call shared by the ff / no-ff variants."""
    error = arrays[0]
    B, D = error.shape
    tb = _choose_tile_rows(B, D, error.dtype.itemsize)
    grid = (pl.cdiv(B, tb),)
    spec = pl.BlockSpec((tb, D), lambda i: (i, 0))

    out_shapes = (
        jax.ShapeDtypeStruct((B, D), error.dtype),   # pid output
        jax.ShapeDtypeStruct((B, D), integ_dtype),   # updated integrity
    )
    return pl.pallas_call(
        kernel,
        out_shape=out_shapes,
        grid=grid,
        in_specs=[spec] * len(arrays),
        out_specs=(spec, spec),
        # Integrity state is a read-modify-write: reuse its HBM buffer.
        input_output_aliases={integ_input_index: 1},
        compiler_params=pltpu.CompilerParams(
            dimension_semantics=("parallel",)),
    )(*arrays)


def _to_2d(x):
    """Lane-dense 2-D view: last dim -> lanes, everything else -> rows."""
    if x.ndim == 2:
        return x
    if x.ndim <= 1:
        return x.reshape(1, -1)
    return x.reshape(-1, x.shape[-1])


@functools.partial(jax.jit,
                   static_argnames=("kp", "ki", "kd"),
                   donate_argnums=(3,))
def _pid_forward_ff(error, error_dot, ff, integrity, *, kp, ki, kd):
    kernel_ff, _ = _make_pid_kernels(kp, ki, kd)
    shape = error.shape
    out2, integ2 = _pid_pallas_call(
        kernel_ff,
        (_to_2d(error), _to_2d(error_dot), _to_2d(ff), _to_2d(integrity)),
        integ_input_index=3,
        integ_dtype=integrity.dtype,
    )
    return out2.reshape(shape), integ2.reshape(shape)


@functools.partial(jax.jit,
                   static_argnames=("kp", "ki", "kd"),
                   donate_argnums=(2,))
def _pid_forward_noff(error, error_dot, integrity, *, kp, ki, kd):
    _, kernel_noff = _make_pid_kernels(kp, ki, kd)
    shape = error.shape
    out2, integ2 = _pid_pallas_call(
        kernel_noff,
        (_to_2d(error), _to_2d(error_dot), _to_2d(integrity)),
        integ_input_index=2,
        integ_dtype=integrity.dtype,
    )
    return out2.reshape(shape), integ2.reshape(shape)


def pid_forward(error, error_dot, ff, integrity, kp, ki, kd):
    """Functional PID step. Returns (pid_output, new_integrity)."""
    if ff is None:
        return _pid_forward_noff(error, error_dot, integrity,
                                 kp=kp, ki=ki, kd=kd)
    return _pid_forward_ff(error, error_dot, ff, integrity,
                           kp=kp, ki=ki, kd=kd)


class PID:
    """Stateful wrapper mirroring the torch nn.Module behaviour."""

    def __init__(self, kp, ki, kd):
        self.kp = float(kp)
        self.ki = float(ki)
        self.kd = float(kd)
        self.integrity = None

    def __call__(self, error, error_dot, ff=None):
        if self.integrity is None:
            self.integrity = jnp.zeros_like(error)
        out, new_integ = pid_forward(error, error_dot, ff, self.integrity,
                                     self.kp, self.ki, self.kd)
        self.integrity = new_integ
        return out

    def reset(self):
        # TODO(synk): `last_error` from the torch module is never used in
        # forward(); only the integrator state is tracked here.
        self.integrity = None


if __name__ == "__main__":
    key = jax.random.PRNGKey(0)
    k1, k2, k3, k4, k5, k6 = jax.random.split(key, 6)

    kp, ki, kd = 2.0, 0.5, 0.25

    # ---- Test 1: lane-aligned [8, 128] batch, two steps, with & without ff.
    B, D = 8, 128
    error1 = jax.random.normal(k1, (B, D), dtype=jnp.float32)
    error_dot1 = jax.random.normal(k2, (B, D), dtype=jnp.float32)
    error2 = jax.random.normal(k3, (B, D), dtype=jnp.float32)
    error_dot2 = jax.random.normal(k4, (B, D), dtype=jnp.float32)
    ff2 = jnp.full((B, D), 0.1, dtype=jnp.float32)

    pid = PID(kp, ki, kd)
    out1 = pid(error1, error_dot1)                 # no ff, integrity = 0
    out2 = pid(error2, error_dot2, ff=ff2)         # accumulated integrity + ff
    jax.block_until_ready((out1, out2))

    ref_integ = error1
    ref1 = kp * error1 + ki * ref_integ + kd * error_dot1
    ref_integ = ref_integ + error2
    ref2 = kp * error2 + ki * ref_integ + kd * error_dot2 + ff2
    assert jnp.allclose(out1, ref1, atol=1e-5), "test1 step1 mismatch"
    assert jnp.allclose(out2, ref2, atol=1e-5), "test1 step2 mismatch"

    # ---- Test 2: tiny geometric-controller style 3-vectors, shape [4, 3].
    e3 = jax.random.normal(k5, (4, 3), dtype=jnp.float32)
    ed3 = jax.random.normal(k6, (4, 3), dtype=jnp.float32)
    pid3 = PID(kp, ki, kd)
    out3 = pid3(e3, ed3)
    out3b = pid3(e3, ed3, ff=0.5 * e3)
    jax.block_until_ready((out3, out3b))

    ref3 = kp * e3 + ki * e3 + kd * ed3
    ref3b = kp * e3 + ki * (2.0 * e3) + kd * ed3 + 0.5 * e3
    assert jnp.allclose(out3, ref3, atol=1e-5), "test2 step1 mismatch"
    assert jnp.allclose(out3b, ref3b, atol=1e-5), "test2 step2 mismatch"

    print("KERNEL_OK")
</pallas_src>

<mosaic_0001>
module attributes {stable_mosaic.version = 11 : i64} {
  func.func @kernel_noff(%arg0: i32, %arg1: memref<8x128xf32, #tpu.memory_space<vmem>>, %arg2: memref<8x128xf32, #tpu.memory_space<vmem>>, %arg3: memref<8x128xf32, #tpu.memory_space<vmem>>, %arg4: memref<8x128xf32, #tpu.memory_space<vmem>>, %arg5: memref<8x128xf32, #tpu.memory_space<vmem>>) attributes {dimension_semantics = [#tpu.dimension_semantics<parallel>], iteration_bounds = array<i64: 1>, scalar_prefetch = 0 : i64, scratch_operands = 0 : i64, tpu.core_type = #tpu.core_type<tc>, window_params = [{transform_indices = @transform_0, window_bounds = array<i64: 8, 128>}, {transform_indices = @transform_1, window_bounds = array<i64: 8, 128>}, {transform_indices = @transform_2, window_bounds = array<i64: 8, 128>}, {transform_indices = @transform_3, window_bounds = array<i64: 8, 128>}, {transform_indices = @transform_4, window_bounds = array<i64: 8, 128>}]} {
    %c0 = arith.constant 0 : index
    %c0_0 = arith.constant 0 : index
    %0 = vector.load %arg1[%c0, %c0_0] : memref<8x128xf32, #tpu.memory_space<vmem>>, vector<8x128xf32>
    %c0_1 = arith.constant 0 : index
    %c0_2 = arith.constant 0 : index
    %1 = vector.load %arg3[%c0_1, %c0_2] : memref<8x128xf32, #tpu.memory_space<vmem>>, vector<8x128xf32>
    %2 = arith.addf %1, %0 : vector<8x128xf32>
    %c0_3 = arith.constant 0 : index
    %c0_4 = arith.constant 0 : index
    %3 = vector.load %arg5[%c0_3, %c0_4] : memref<8x128xf32, #tpu.memory_space<vmem>>, vector<8x128xf32>
    tpu.vector_store %arg5[%c0_3, %c0_4], %2 {strides = array<i32>} : memref<8x128xf32, #tpu.memory_space<vmem>>, vector<8x128xf32>,
    %cst = arith.constant 2.000000e+00 : f32
    %4 = vector.broadcast %cst : f32 to vector<8x128xf32>
    %5 = arith.mulf %4, %0 : vector<8x128xf32>
    %cst_5 = arith.constant 5.000000e-01 : f32
    %6 = vector.broadcast %cst_5 : f32 to vector<8x128xf32>
    %7 = arith.mulf %6, %2 : vector<8x128xf32>
    %8 = arith.addf %5, %7 : vector<8x128xf32>
    %c0_6 = arith.constant 0 : index
    %c0_7 = arith.constant 0 : index
    %9 = vector.load %arg2[%c0_6, %c0_7] : memref<8x128xf32, #tpu.memory_space<vmem>>, vector<8x128xf32>
    %cst_8 = arith.constant 2.500000e-01 : f32
    %10 = vector.broadcast %cst_8 : f32 to vector<8x128xf32>
    %11 = arith.mulf %10, %9 : vector<8x128xf32>
    %12 = arith.addf %8, %11 : vector<8x128xf32>
    %c0_9 = arith.constant 0 : index
    %c0_10 = arith.constant 0 : index
    %13 = vector.load %arg4[%c0_9, %c0_10] : memref<8x128xf32, #tpu.memory_space<vmem>>, vector<8x128xf32>
    tpu.vector_store %arg4[%c0_9, %c0_10], %12 {strides = array<i32>} : memref<8x128xf32, #tpu.memory_space<vmem>>, vector<8x128xf32>,
    return
  }
  func.func @transform_0(%arg0: i32) -> (i32, i32) {
    %c0_i32 = arith.constant 0 : i32
    %c0_i32_0 = arith.constant 0 : i32
    return %arg0, %c0_i32 : i32, i32
  }
  func.func @transform_1(%arg0: i32) -> (i32, i32) {
    %c0_i32 = arith.constant 0 : i32
    %c0_i32_0 = arith.constant 0 : i32
    return %arg0, %c0_i32 : i32, i32
  }
  func.func @transform_2(%arg0: i32) -> (i32, i32) {
    %c0_i32 = arith.constant 0 : i32
    %c0_i32_0 = arith.constant 0 : i32
    return %arg0, %c0_i32 : i32, i32
  }
  func.func @transform_3(%arg0: i32) -> (i32, i32) {
    %c0_i32 = arith.constant 0 : i32
    %c0_i32_0 = arith.constant 0 : i32
    return %arg0, %c0_i32 : i32, i32
  }
  func.func @transform_4(%arg0: i32) -> (i32, i32) {
    %c0_i32 = arith.constant 0 : i32
    %c0_i32_0 = arith.constant 0 : i32
    return %arg0, %c0_i32 : i32, i32
  }
}

</mosaic_0001>

<llo_original>
// kernel: _pid_forward_noff.1
$region0: #{_pid_forward_noff.1}
  #allocation0 [shape = 'u32[]', space=smem, size = 0x4, offset = 0x4, fixed_abs, tag = 'smem constant byte address 0x4 - core index']
  #allocation1 [shape = 'u32[72,128]{1,0:T(1,128)}', space=vmem, size = 0x9000, scoped, tag = 'internal scratch']
  %s0 = inlined_call_operand.vmem [shape: f32[8,128], index: 0, kind: input, shape index: {}]
  %s1 = inlined_call_operand.hbm [shape: f32[8,128], index: 1, kind: input, shape index: {}]
  %s2 = inlined_call_operand.vmem [shape: f32[8,128], index: 2, kind: input, shape index: {}, may-alias: {2,4}]
  %s3 = inlined_call_operand.hbm [shape: f32[8,128], index: 3, kind: output, shape index: {0}]
  %s4 = inlined_call_operand.vmem [shape: f32[8,128], index: 4, kind: output, shape index: {1}, may-alias: {2,4}]
  %5 = xla_tuple %s3, %s4
  %s6 = sld [smem:[#allocation0]]
  $region34: #{_pid_forward_noff.1} parent=0
    _
  %s8 = ssub.s32 1, %s6
  %s9 = scalar_select 0, %s8, %s6
  $region1: #{_pid_forward_noff.1} parent=0
    #allocation2 [shape = 'u8[4096]{0}', space=vmem, size = 0x1000, scoped, tag = 'input window, operand 1, single buffered']
    #allocation3 [shape = 's32[1]{0}', space=sflag, size = 0x4, scoped, tag = 'scoped memory for _pid_forward_noff.1']
    #allocation4 [shape = 's32[1]{0}', space=sflag, size = 0x4, scoped, tag = 'scoped memory for _pid_forward_noff.1']
    #allocation5 [shape = 'u8[4096]{0}', space=vmem, size = 0x1000, scoped, tag = 'output window, operand 0, single buffered']
    %10 = vsyncpa [#allocation3], 0
    %11 = vsyncpa [#allocation4], 0
    // Predicated region
    $region2: #{_pid_forward_noff.1} parent=1 // pred_check
      _
    $region3: #{_pid_forward_noff.1} parent=1 // pred_check_branch
      %13 = sbr.rel (0) target = $region5
    $region4: #{_pid_forward_noff.1} parent=1 // pred_region
      _
    $region5: #{_pid_forward_noff.1} parent=1 // pred_fallthru
      _
    // Predicated region
    $region6: #{_pid_forward_noff.1} parent=1 // pred_check
      _
    $region7: #{_pid_forward_noff.1} parent=1 // pred_check_branch
      %15 = sbr.rel (0) target = $region9
    $region8: #{_pid_forward_noff.1} parent=1 // pred_region
      %17 = vsyncadd [#allocation3], 0
      %s19 = sshll.u32 %s1, 4
      %s20 = int_to_ptr.hbm [resolvable:$true] %s19
      %s21 = sshll.u32 [#allocation2], 4
      %s22 = int_to_ptr.vmem [resolvable:$true] %s21
      %24 = dma.hbm_to_vmem [thread:$0]  %s20, 128, %s22, [#allocation3]
    $region9: #{_pid_forward_noff.1} parent=1 // pred_fallthru
      _
    // Predicated region
    $region10: #{_pid_forward_noff.1} parent=1 // pred_check
      _
    $region11: #{_pid_forward_noff.1} parent=1 // pred_check_branch
      %26 = sbr.rel (0) target = $region13
    $region12: #{_pid_forward_noff.1} parent=1 // pred_region
      _
    $region13: #{_pid_forward_noff.1} parent=1 // pred_fallthru
      _
    // Predicated region
    $region14: #{_pid_forward_noff.1} parent=1 // pred_check
      _
    $region15: #{_pid_forward_noff.1} parent=1 // pred_check_branch
      %28 = sbr.rel (0) target = $region17
    $region16: #{_pid_forward_noff.1} parent=1 // pred_region
      %30 = dma.done [#allocation3], 128
    $region17: #{_pid_forward_noff.1} parent=1 // pred_fallthru
      _
    %v31 = vld [vmem:[%s0] sm:$0xff]
    %v32 = vld [vmem:[%s2] sm:$0xff]
    %v33 = vadd.f32 %v32, %v31
    %34 = vst [vmem:[%s4] sm:$0xff] %v33
    %v35 = vmul.f32 %v31, 2.0
    %v36 = vmul.f32 %v33, 0.5
    %v37 = vadd.f32 %v35, %v36
    %v38 = vld [vmem:[#allocation2] sm:$0xff]
    %v39 = vmul.f32 %v38, 0.25
    %v40 = vadd.f32 %v37, %v39
    %41 = vst [vmem:[#allocation5] sm:$0xff] %v40
    // Predicated region
    $region18: #{_pid_forward_noff.1} parent=1 // pred_check
      _
    $region19: #{_pid_forward_noff.1} parent=1 // pred_check_branch
      %43 = sbr.rel (0) target = $region21
    $region20: #{_pid_forward_noff.1} parent=1 // pred_region
      %45 = vsyncadd [#allocation4], 0
      %s47 = sshll.u32 [#allocation5], 4
      %s48 = int_to_ptr.vmem [resolvable:$true] %s47
      %s49 = sshll.u32 %s3, 4
      %s50 = int_to_ptr.hbm [resolvable:$true] %s49
      %52 = dma.vmem_to_hbm [thread:$0]  %s48, 128, %s50, [#allocation4]
    $region21: #{_pid_forward_noff.1} parent=1 // pred_fallthru
      _
    // Predicated region
    $region22: #{_pid_forward_noff.1} parent=1 // pred_check
      _
    $region23: #{_pid_forward_noff.1} parent=1 // pred_check_branch
      %54 = sbr.rel (0) target = $region25
    $region24: #{_pid_forward_noff.1} parent=1 // pred_region
      _
    $region25: #{_pid_forward_noff.1} parent=1 // pred_fallthru
      _
    // Predicated region
    $region26: #{_pid_forward_noff.1} parent=1 // pred_check
      _
    $region27: #{_pid_forward_noff.1} parent=1 // pred_check_branch
      %56 = sbr.rel (0) target = $region29
    $region28: #{_pid_forward_noff.1} parent=1 // pred_region
      %58 = dma.done [#allocation4], 128
    $region29: #{_pid_forward_noff.1} parent=1 // pred_fallthru
      _
    // Predicated region
    $region30: #{_pid_forward_noff.1} parent=1 // pred_check
      _
    $region31: #{_pid_forward_noff.1} parent=1 // pred_check_branch
      %60 = sbr.rel (0) target = $region33
    $region32: #{_pid_forward_noff.1} parent=1 // pred_region
      _
    $region33: #{_pid_forward_noff.1} parent=1 // pred_fallthru
      _
    %61 = vsyncpa [#allocation3], 1
    %62 = vsyncpa [#allocation4], 1

</llo_original>
